<compile_context>
chip_gen: v5e
topology: v5e:2x2
jax: 0.10.0
libtpu: 0.0.40
codegen_flags: <defaults>
</compile_context>

<pallas_src>
import numpy as np

import jax
import jax.numpy as jnp
from jax.experimental import pallas as pl
from jax.experimental.pallas import tpu as pltpu


NTAP = 4  # ConvTranspose2d kernel size (vertical taps / output rows of the 1x1->4x4 deconv)


# ----------------------------------------------------------------------------
# Init-time weight preprocessing (all layout work hoisted out of the forward).
# Activation layout inside the kernel: rows = n*H + y, lanes = x*C + c.
# ----------------------------------------------------------------------------
def _ct_first_mats(w, batch):
    """ConvTranspose2d(nz, C, 4, 1, 0) on a 1x1 input, as two matmul stages.

    wcat  (nz, NTAP*blk): t = z @ wcat; lane block ky of row n is output row ky
                          of sample n (lane layout x*C + c).
    a_stk (NTAP*rows_out, rows_in): y = sum_k A_k @ t[:, k*blk:(k+1)*blk] with
                          A_k = a_stk[k*rows_out:(k+1)*rows_out] scattering
                          sample rows to output rows n*H + k.
    """
    w = np.asarray(w, np.float32)                       # (nz, C, 4, 4)
    nz, c, k, _ = w.shape
    blk = k * c
    wcat = np.transpose(w, (0, 2, 3, 1)).reshape(nz, k * blk)
    rows_out, rows_in = batch * k, batch
    a_stk = np.zeros((k * rows_out, rows_in), np.float32)
    for ky in range(k):
        for n in range(batch):
            a_stk[ky * rows_out + n * k + ky, n] = 1.0
    return wcat, a_stk, blk, rows_out, rows_in


def _ct_up_mats(w, batch, h_in, w_in, blk_pad=None):
    """ConvTranspose2d(Cin, Cout, 4, stride=2, padding=1).

    y[oy, ox] = sum_{iy,ix,ky,kx} x[iy, ix] * W[ky, kx]
    with oy = 2*iy - 1 + ky, ox = 2*ix - 1 + kx.
      wcat  (w_in*Cin, NTAP*blk_pad): horizontal taps + channel contraction +
                                      x-interleave (lanes x*Cout + c, zero-padded
                                      to blk_pad for lane-dense slices).
      a_stk (NTAP*rows_out, rows_in): vertical taps + y-interleave + batch
                                      scatter, one block per ky.
    """
    w = np.asarray(w, np.float32)                       # (Cin, Cout, 4, 4)
    cin, cout, K, _ = w.shape
    h_out, w_out = 2 * h_in, 2 * w_in
    blk = w_out * cout
    if blk_pad is None:
        blk_pad = blk
    assert blk_pad >= blk
    wcat = np.zeros((w_in * cin, K * blk_pad), np.float32)
    for ky in range(K):
        for ix in range(w_in):
            for kx in range(K):
                ox = 2 * ix - 1 + kx
                if 0 <= ox < w_out:
                    wcat[ix * cin:(ix + 1) * cin,
                         ky * blk_pad + ox * cout: ky * blk_pad + (ox + 1) * cout] = \
                        w[:, :, ky, kx]
    rows_out, rows_in = batch * h_out, batch * h_in
    a_stk = np.zeros((K * rows_out, rows_in), np.float32)
    for ky in range(K):
        for n in range(batch):
            for iy in range(h_in):
                oy = 2 * iy - 1 + ky
                if 0 <= oy < h_out:
                    a_stk[ky * rows_out + n * h_out + oy, n * h_in + iy] = 1.0
    return wcat, a_stk, blk_pad, rows_out, rows_in


def _tile_gb(gamma_c, beta_c, w_sp):
    """Tile per-channel BN gamma/beta into the lane layout x*C + c."""
    g = np.tile(np.asarray(gamma_c, np.float32).reshape(-1), w_sp)
    b = np.tile(np.asarray(beta_c, np.float32).reshape(-1), w_sp)
    return g, b


def _pack_rows(mats, lane_width, dtype):
    """Stack matrices along rows; each row offset is padded to a multiple of 8."""
    offs, r = [], 0
    for m in mats:
        offs.append(r)
        r += ((m.shape[0] + 7) // 8) * 8
    slab = np.zeros((max(r, 8), lane_width), dtype)
    for m, o in zip(mats, offs):
        slab[o:o + m.shape[0], :m.shape[1]] = m
    return slab, offs


def init_dcdecoder_params(key, isize, nz, ngf, batch, batch_chunk=None):
    """Mirrors the PyTorch DCDecoder constructor (act='relu', normalize='bn').

    batch_chunk: samples processed per grid step.  Defaults to `batch` (one
    chunk), which reproduces PyTorch train-mode BatchNorm exactly.
    """
    assert isize % 16 == 0, 'isize has to be a multiple of 16'
    if batch_chunk is None:
        batch_chunk = batch
    assert batch % batch_chunk == 0
    assert batch_chunk == batch or batch_chunk % 8 == 0, \
        'multi-chunk grids need an 8-row-aligned z block'

    cngf, tisize = ngf // 2, 4
    while tisize != isize:
        cngf *= 2
        tisize *= 2

    def nxt():
        nonlocal key
        key, sub = jax.random.split(key)
        return sub

    raw_w, wcats, astks, gb_rows, meta = [], [], [], [], []

    # ConvTranspose2d(nz, cngf, 4, 1, 0) + BN + ReLU     : 1x1 -> 4x4
    w = 0.05 * jax.random.normal(nxt(), (nz, cngf, 4, 4), jnp.float32)
    raw_w.append(w)
    wcat, astk, blk, ro, ri = _ct_first_mats(np.asarray(w), batch_chunk)
    wcats.append(wcat)
    astks.append(astk)
    g, b = _tile_gb(np.ones(cngf), np.zeros(cngf), 4)     # PyTorch BN init: gamma=1, beta=0
    gb_rows += [g, b]
    meta.append(dict(blk=blk, rows_out=ro, rows_in=ri, bn=True, bn_idx=0,
                     chan=cngf, count=float(batch_chunk * 4 * 4)))
    csize, cchan, bn_idx = 4, cngf, 1

    # ConvTranspose2d(cchan, cchan//2, 4, 2, 1) + BN + ReLU : csize -> 2*csize
    while csize < isize // 2:
        w = 0.05 * jax.random.normal(nxt(), (cchan, cchan // 2, 4, 4), jnp.float32)
        raw_w.append(w)
        wcat, astk, blk, ro, ri = _ct_up_mats(np.asarray(w), batch_chunk, csize, csize)
        cchan //= 2
        csize *= 2
        assert (csize & (csize - 1)) == 0  # roll-reduce needs a power-of-two width
        wcats.append(wcat)
        astks.append(astk)
        g, b = _tile_gb(np.ones(cchan), np.zeros(cchan), csize)
        gb_rows += [g, b]
        meta.append(dict(blk=blk, rows_out=ro, rows_in=ri, bn=True, bn_idx=bn_idx,
                         chan=cchan, count=float(batch_chunk * csize * csize)))
        bn_idx += 1

    # ConvTranspose2d(cchan, 1, 4, 2, 1) + Tanh           : isize//2 -> isize
    w = 0.05 * jax.random.normal(nxt(), (cchan, 1, 4, 4), jnp.float32)
    raw_w.append(w)
    blk_pad = ((2 * csize * 1 + 127) // 128) * 128        # lane-dense final layer
    wcat, astk, blk, ro, ri = _ct_up_mats(np.asarray(w), batch_chunk, csize, csize,
                                          blk_pad=blk_pad)
    wcats.append(wcat)
    astks.append(astk)
    meta.append(dict(blk=blk, rows_out=ro, rows_in=ri, bn=False))

    # Pack everything into three slabs (4 pallas_call inputs total incl. z).
    # Weights go to bf16 (native MXU input dtype); acat is 0/1 so bf16 is exact;
    # gamma/beta stay f32 (VPU-side math).
    w_lanes = max(m.shape[1] for m in wcats)
    a_lanes = max(m.shape[1] for m in astks)
    w_slab, w_offs = _pack_rows(wcats, w_lanes, np.float32)
    a_slab, a_offs = _pack_rows(astks, a_lanes, np.float32)
    gb_w = max(len(r) for r in gb_rows)
    gb_slab = np.zeros((len(gb_rows), gb_w), np.float32)
    for i, r in enumerate(gb_rows):
        gb_slab[i, :len(r)] = r
    for m, wo, wc, ao in zip(meta, w_offs, wcats, a_offs):
        m['w_off'], m['w_rows'], m['a_off'] = wo, wc.shape[0], ao

    return dict(
        meta=meta, raw_w=raw_w, isize=isize, batch=batch, batch_chunk=batch_chunk,
        out_lanes=meta[-1]['blk'],
        wcat_all=jnp.asarray(w_slab, jnp.bfloat16),
        acat_all=jnp.asarray(a_slab, jnp.bfloat16),
        gb_all=jnp.asarray(gb_slab, jnp.float32),
    )


# ----------------------------------------------------------------------------
# The single fused Pallas kernel (one grid step = one batch chunk).
# ----------------------------------------------------------------------------
def _make_decoder_kernel(meta):
    def kernel(z_ref, w_ref, a_ref, gb_ref, out_ref):
        x = z_ref[...].astype(jnp.bfloat16)                # (rows, lanes)
        for m in meta:
            blk, ro, ri = m['blk'], m['rows_out'], m['rows_in']
            wo, wr, ao = m['w_off'], m['w_rows'], m['a_off']

            # stage 1: horizontal taps + channel contraction (one wide bf16 MXU dot)
            wcat = w_ref[wo:wo + wr, :NTAP * blk]
            t = jnp.dot(x, wcat, preferred_element_type=jnp.float32)
            t = t.astype(jnp.bfloat16)

            # stage 2: vertical taps + y-interleave + batch scatter as 4 accumulated
            # dots (replaces the concat / sublane restack of the previous version).
            y = None
            for k in range(NTAP):
                a_k = a_ref[ao + k * ro: ao + (k + 1) * ro, :ri]
                p = jnp.dot(a_k, t[:, k * blk:(k + 1) * blk],
                            preferred_element_type=jnp.float32)
                y = p if y is None else y + p

            if m['bn']:
                # BatchNorm (train-mode batch statistics) + ReLU, fused, in f32.
                inv_n = 1.0 / m['count']
                s1 = jnp.sum(y, axis=0, keepdims=True)       # (1, blk)
                s2 = jnp.sum(y * y, axis=0, keepdims=True)   # (1, blk)
                # Per-channel reduce over the x positions: lanes are x*C + c with
                # blk = W*C, so log2(W) circular roll-adds (XLU) leave every lane
                # holding its channel's sum (already broadcast back).
                sh = m['chan']
                while sh < blk:
                    s1 = s1 + pltpu.roll(s1, shift=sh, axis=1)
                    s2 = s2 + pltpu.roll(s2, shift=sh, axis=1)
                    sh *= 2
                mean = s1 * inv_n
                var = s2 * inv_n - mean * mean               # biased batch variance
                i2 = 2 * m['bn_idx']
                gamma = gb_ref[i2:i2 + 1, :blk]
                beta = gb_ref[i2 + 1:i2 + 2, :blk]
                scale = gamma * jax.lax.rsqrt(var + 1e-5)
                shift = beta - mean * scale
                x = jnp.maximum(y * scale + shift, 0.0).astype(jnp.bfloat16)
            else:
                out_ref[...] = jnp.tanh(y).astype(out_ref.dtype)   # final Tanh

    return kernel


def dcdecoder_forward(params, z_nchw):
    """z_nchw: (N, nz, 1, 1) -> (N, 1, isize, isize), matching PyTorch NCHW."""
    n, isize = z_nchw.shape[0], params['isize']
    cb = params['batch_chunk']
    assert n % cb == 0, 'batch must be a multiple of the chunk the params were built for'
    num_chunks = n // cb
    z2d = z_nchw.reshape(n, -1)
    nz = z2d.shape[1]
    w_all, a_all, gb_all = params['wcat_all'], params['acat_all'], params['gb_all']
    out_w = params['out_lanes']

    out = pl.pallas_call(
        _make_decoder_kernel(params['meta']),
        grid=(num_chunks,),
        in_specs=[
            pl.BlockSpec((cb, nz), lambda i: (i, 0)),
            pl.BlockSpec(w_all.shape, lambda i: (0, 0)),   # weights resident across chunks
            pl.BlockSpec(a_all.shape, lambda i: (0, 0)),
            pl.BlockSpec(gb_all.shape, lambda i: (0, 0)),
        ],
        out_specs=pl.BlockSpec((cb * isize, out_w), lambda i: (i, 0)),
        out_shape=jax.ShapeDtypeStruct((n * isize, out_w), jnp.float32),
        compiler_params=pltpu.CompilerParams(dimension_semantics=('parallel',)),
    )(z2d, w_all, a_all, gb_all)
    # rows are n*isize + oy; lanes 0..isize-1 are ox (remaining lanes are zero pad).
    return out[:, :isize].reshape(n, 1, isize, isize)


# ----------------------------------------------------------------------------
# Pure-JAX reference (direct transcription of the ConvTranspose2d definition).
# ----------------------------------------------------------------------------
def _ref_ct_s2p1(x, w):
    n, cin, h, wd = x.shape
    cout = w.shape[1]
    ho, wo = 2 * h, 2 * wd
    y = jnp.zeros((n, cout, ho, wo), jnp.float32)
    for ky in range(4):
        for kx in range(4):
            c = jnp.einsum('nihw,io->nohw', x, w[:, :, ky, kx],
                           precision=jax.lax.Precision.HIGHEST)
            iys = np.array([iy for iy in range(h) if 0 <= 2 * iy - 1 + ky < ho])
            ixs = np.array([ix for ix in range(wd) if 0 <= 2 * ix - 1 + kx < wo])
            if iys.size == 0 or ixs.size == 0:
                continue
            y = y.at[:, :, (2 * iys - 1 + ky)[:, None],
                     (2 * ixs - 1 + kx)[None, :]].add(
                c[:, :, iys[:, None], ixs[None, :]])
    return y


def _ref_bn_relu(x):
    mean = jnp.mean(x, axis=(0, 2, 3), keepdims=True)
    var = jnp.mean(jnp.square(x - mean), axis=(0, 2, 3), keepdims=True)
    return jnp.maximum((x - mean) * jax.lax.rsqrt(var + 1e-5), 0.0)


def dcdecoder_reference(params, z_nchw):
    ws = params['raw_w']
    z = z_nchw[:, :, 0, 0]
    x = jnp.einsum('nk,kchw->nchw', z, ws[0],
                   precision=jax.lax.Precision.HIGHEST)
    x = _ref_bn_relu(x)
    for w in ws[1:-1]:
        x = _ref_bn_relu(_ref_ct_s2p1(x, w))
    return jnp.tanh(_ref_ct_s2p1(x, ws[-1]))


# ----------------------------------------------------------------------------
if __name__ == "__main__":
    ISIZE, NZ, NGF, BATCH = 16, 8, 16, 2

    key = jax.random.PRNGKey(0)
    kz, kp = jax.random.split(key)
    params = init_dcdecoder_params(kp, ISIZE, NZ, NGF, BATCH)
    z = jax.random.normal(kz, (BATCH, NZ, 1, 1), jnp.float32)

    out = jax.block_until_ready(dcdecoder_forward(params, z))

    assert out.shape == (BATCH, 1, ISIZE, ISIZE), out.shape
    assert bool(jnp.all(jnp.isfinite(out)))
    assert bool(jnp.all(jnp.abs(out) <= 1.0 + 1e-6))      # tanh range

    ref = dcdecoder_reference(params, z)
    err = float(jnp.max(jnp.abs(out - ref)))
    # bf16 MXU operands introduce ~1e-2-level error vs. the HIGHEST-precision
    # f32 reference; well below structural-bug magnitudes.
    assert err < 7.5e-2, f"mismatch vs pure-JAX reference: {err}"

    print("KERNEL_OK")
</pallas_src>

<mosaic_0001>
module attributes {stable_mosaic.version = 11 : i64} {
  func.func @kernel(%arg0: i32, %arg1: memref<2x8xf32, #tpu.memory_space<vmem>>, %arg2: memref<264x512xbf16, #tpu.memory_space<vmem>>, %arg3: memref<224x16xbf16, #tpu.memory_space<vmem>>, %arg4: memref<4x128xf32, #tpu.memory_space<vmem>>, %arg5: memref<32x128xf32, #tpu.memory_space<vmem>>) attributes {dimension_semantics = [#tpu.dimension_semantics<parallel>], iteration_bounds = array<i64: 1>, scalar_prefetch = 0 : i64, scratch_operands = 0 : i64, tpu.core_type = #tpu.core_type<tc>, window_params = [{transform_indices = @transform_0, window_bounds = array<i64: 2, 8>}, {pipeline_mode = #tpu.pipeline_mode<synchronous>, transform_indices = @transform_1, window_bounds = array<i64: 264, 512>}, {pipeline_mode = #tpu.pipeline_mode<synchronous>, transform_indices = @transform_2, window_bounds = array<i64: 224, 16>}, {pipeline_mode = #tpu.pipeline_mode<synchronous>, transform_indices = @transform_3, window_bounds = array<i64: 4, 128>}, {transform_indices = @transform_4, window_bounds = array<i64: 32, 128>}]} {
    %c0 = arith.constant 0 : index
    %c0_0 = arith.constant 0 : index
    %0 = vector.load %arg1[%c0, %c0_0] : memref<2x8xf32, #tpu.memory_space<vmem>>, vector<2x8xf32>
    %1 = arith.truncf %0 : vector<2x8xf32> to vector<2x8xbf16>
    %c0_1 = arith.constant 0 : index
    %c0_2 = arith.constant 0 : index
    %2 = vector.load %arg2[%c0_1, %c0_2] : memref<264x512xbf16, #tpu.memory_space<vmem>>, vector<8x512xbf16>
    %cst = arith.constant dense<0.000000e+00> : vector<2x512xf32>
    %3 = tpu.matmul %1, %2, %cst {dimension_numbers = #tpu.dot_dimension_numbers<[1], [0], [0], [1], [0, 0, 1, 1], [], []>} : vector<2x8xbf16>, vector<8x512xbf16>, vector<2x512xf32> -> vector<2x512xf32>
    %4 = arith.truncf %3 : vector<2x512xf32> to vector<2x512xbf16>
    %c0_3 = arith.constant 0 : index
    %c0_4 = arith.constant 0 : index
    %5 = vector.load %arg3[%c0_3, %c0_4] : memref<224x16xbf16, #tpu.memory_space<vmem>>, vector<8x2xbf16>
    %6 = vector.extract_strided_slice %4 {offsets = [0, 0], sizes = [2, 128], strides = [1, 1]} : vector<2x512xbf16> to vector<2x128xbf16>
    %cst_5 = arith.constant dense<0.000000e+00> : vector<8x128xf32>
    %7 = tpu.matmul %5, %6, %cst_5 {dimension_numbers = #tpu.dot_dimension_numbers<[1], [0], [0], [1], [0, 0, 1, 1], [], []>} : vector<8x2xbf16>, vector<2x128xbf16>, vector<8x128xf32> -> vector<8x128xf32>
    %c8 = arith.constant 8 : index
    %c0_6 = arith.constant 0 : index
    %8 = vector.load %arg3[%c8, %c0_6] : memref<224x16xbf16, #tpu.memory_space<vmem>>, vector<8x2xbf16>
    %9 = vector.extract_strided_slice %4 {offsets = [0, 128], sizes = [2, 128], strides = [1, 1]} : vector<2x512xbf16> to vector<2x128xbf16>
    %cst_7 = arith.constant dense<0.000000e+00> : vector<8x128xf32>
    %10 = tpu.matmul %8, %9, %cst_7 {dimension_numbers = #tpu.dot_dimension_numbers<[1], [0], [0], [1], [0, 0, 1, 1], [], []>} : vector<8x2xbf16>, vector<2x128xbf16>, vector<8x128xf32> -> vector<8x128xf32>
    %11 = arith.addf %7, %10 : vector<8x128xf32>
    %c16 = arith.constant 16 : index
    %c0_8 = arith.constant 0 : index
    %12 = vector.load %arg3[%c16, %c0_8] : memref<224x16xbf16, #tpu.memory_space<vmem>>, vector<8x2xbf16>
    %13 = vector.extract_strided_slice %4 {offsets = [0, 256], sizes = [2, 128], strides = [1, 1]} : vector<2x512xbf16> to vector<2x128xbf16>
    %cst_9 = arith.constant dense<0.000000e+00> : vector<8x128xf32>
    %14 = tpu.matmul %12, %13, %cst_9 {dimension_numbers = #tpu.dot_dimension_numbers<[1], [0], [0], [1], [0, 0, 1, 1], [], []>} : vector<8x2xbf16>, vector<2x128xbf16>, vector<8x128xf32> -> vector<8x128xf32>
    %15 = arith.addf %11, %14 : vector<8x128xf32>
    %c24 = arith.constant 24 : index
    %c0_10 = arith.constant 0 : index
    %16 = vector.load %arg3[%c24, %c0_10] : memref<224x16xbf16, #tpu.memory_space<vmem>>, vector<8x2xbf16>
    %17 = vector.extract_strided_slice %4 {offsets = [0, 384], sizes = [2, 128], strides = [1, 1]} : vector<2x512xbf16> to vector<2x128xbf16>
    %cst_11 = arith.constant dense<0.000000e+00> : vector<8x128xf32>
    %18 = tpu.matmul %16, %17, %cst_11 {dimension_numbers = #tpu.dot_dimension_numbers<[1], [0], [0], [1], [0, 0, 1, 1], [], []>} : vector<8x2xbf16>, vector<2x128xbf16>, vector<8x128xf32> -> vector<8x128xf32>
    %19 = arith.addf %15, %18 : vector<8x128xf32>
    %cst_12 = arith.constant dense<0.000000e+00> : vector<128xf32>
    %20 = vector.multi_reduction <add>, %19, %cst_12 [0] : vector<8x128xf32> to vector<128xf32>
    %21 = vector.shape_cast %20 : vector<128xf32> to vector<1x128xf32>
    %22 = arith.mulf %19, %19 : vector<8x128xf32>
    %cst_13 = arith.constant dense<0.000000e+00> : vector<128xf32>
    %23 = vector.multi_reduction <add>, %22, %cst_13 [0] : vector<8x128xf32> to vector<128xf32>
    %24 = vector.shape_cast %23 : vector<128xf32> to vector<1x128xf32>
    %c32_i32 = arith.constant 32 : i32
    %25 = tpu.dynamic_rotate %21 by %c32_i32 dim 1 : vector<1x128xf32>, i32 -> vector<1x128xf32>
    %26 = arith.addf %21, %25 : vector<1x128xf32>
    %c32_i32_14 = arith.constant 32 : i32
    %27 = tpu.dynamic_rotate %24 by %c32_i32_14 dim 1 : vector<1x128xf32>, i32 -> vector<1x128xf32>
    %28 = arith.addf %24, %27 : vector<1x128xf32>
    %c64_i32 = arith.constant 64 : i32
    %29 = tpu.dynamic_rotate %26 by %c64_i32 dim 1 : vector<1x128xf32>, i32 -> vector<1x128xf32>
    %30 = arith.addf %26, %29 : vector<1x128xf32>
    %c64_i32_15 = arith.constant 64 : i32
    %31 = tpu.dynamic_rotate %28 by %c64_i32_15 dim 1 : vector<1x128xf32>, i32 -> vector<1x128xf32>
    %32 = arith.addf %28, %31 : vector<1x128xf32>
    %cst_16 = arith.constant 3.125000e-02 : f32
    %33 = vector.broadcast %cst_16 : f32 to vector<1x128xf32>
    %34 = arith.mulf %30, %33 : vector<1x128xf32>
    %cst_17 = arith.constant 3.125000e-02 : f32
    %35 = vector.broadcast %cst_17 : f32 to vector<1x128xf32>
    %36 = arith.mulf %32, %35 : vector<1x128xf32>
    %37 = arith.mulf %34, %34 : vector<1x128xf32>
    %38 = arith.subf %36, %37 : vector<1x128xf32>
    %c0_18 = arith.constant 0 : index
    %c0_19 = arith.constant 0 : index
    %39 = vector.load %arg4[%c0_18, %c0_19] : memref<4x128xf32, #tpu.memory_space<vmem>>, vector<1x128xf32>
    %c1 = arith.constant 1 : index
    %c0_20 = arith.constant 0 : index
    %40 = vector.load %arg4[%c1, %c0_20] : memref<4x128xf32, #tpu.memory_space<vmem>>, vector<1x128xf32>
    %cst_21 = arith.constant 9.99999974E-6 : f32
    %41 = vector.broadcast %cst_21 : f32 to vector<1x128xf32>
    %42 = arith.addf %38, %41 : vector<1x128xf32>
    %43 = math.rsqrt %42 : vector<1x128xf32>
    %44 = arith.mulf %39, %43 : vector<1x128xf32>
    %45 = arith.mulf %34, %44 : vector<1x128xf32>
    %46 = arith.subf %40, %45 : vector<1x128xf32>
    %47 = vector.broadcast %44 : vector<1x128xf32> to vector<8x128xf32>
    %48 = arith.mulf %19, %47 : vector<8x128xf32>
    %49 = vector.broadcast %46 : vector<1x128xf32> to vector<8x128xf32>
    %50 = arith.addf %48, %49 : vector<8x128xf32>
    %cst_22 = arith.constant 0.000000e+00 : f32
    %51 = vector.broadcast %cst_22 : f32 to vector<8x128xf32>
    %52 = arith.maximumf %50, %51 : vector<8x128xf32>
    %53 = arith.truncf %52 : vector<8x128xf32> to vector<8x128xbf16>
    %c8_23 = arith.constant 8 : index
    %c0_24 = arith.constant 0 : index
    %54 = vector.load %arg2[%c8_23, %c0_24] : memref<264x512xbf16, #tpu.memory_space<vmem>>, vector<128x512xbf16>
    %cst_25 = arith.constant dense<0.000000e+00> : vector<8x512xf32>
    %55 = tpu.matmul %53, %54, %cst_25 {dimension_numbers = #tpu.dot_dimension_numbers<[1], [0], [0], [1], [0, 0, 1, 1], [], []>} : vector<8x128xbf16>, vector<128x512xbf16>, vector<8x512xf32> -> vector<8x512xf32>
    %56 = arith.truncf %55 : vector<8x512xf32> to vector<8x512xbf16>
    %c32 = arith.constant 32 : index
    %c0_26 = arith.constant 0 : index
    %57 = vector.load %arg3[%c32, %c0_26] : memref<224x16xbf16, #tpu.memory_space<vmem>>, vector<16x8xbf16>
    %58 = vector.extract_strided_slice %56 {offsets = [0, 0], sizes = [8, 128], strides = [1, 1]} : vector<8x512xbf16> to vector<8x128xbf16>
    %cst_27 = arith.constant dense<0.000000e+00> : vector<16x128xf32>
    %59 = tpu.matmul %57, %58, %cst_27 {dimension_numbers = #tpu.dot_dimension_numbers<[1], [0], [0], [1], [0, 0, 1, 1], [], []>} : vector<16x8xbf16>, vector<8x128xbf16>, vector<16x128xf32> -> vector<16x128xf32>
    %c48 = arith.constant 48 : index
    %c0_28 = arith.constant 0 : index
    %60 = vector.load %arg3[%c48, %c0_28] : memref<224x16xbf16, #tpu.memory_space<vmem>>, vector<16x8xbf16>
    %61 = vector.extract_strided_slice %56 {offsets = [0, 128], sizes = [8, 128], strides = [1, 1]} : vector<8x512xbf16> to vector<8x128xbf16>
    %cst_29 = arith.constant dense<0.000000e+00> : vector<16x128xf32>
    %62 = tpu.matmul %60, %61, %cst_29 {dimension_numbers = #tpu.dot_dimension_numbers<[1], [0], [0], [1], [0, 0, 1, 1], [], []>} : vector<16x8xbf16>, vector<8x128xbf16>, vector<16x128xf32> -> vector<16x128xf32>
    %63 = arith.addf %59, %62 : vector<16x128xf32>
    %c64 = arith.constant 64 : index
    %c0_30 = arith.constant 0 : index
    %64 = vector.load %arg3[%c64, %c0_30] : memref<224x16xbf16, #tpu.memory_space<vmem>>, vector<16x8xbf16>
    %65 = vector.extract_strided_slice %56 {offsets = [0, 256], sizes = [8, 128], strides = [1, 1]} : vector<8x512xbf16> to vector<8x128xbf16>
    %cst_31 = arith.constant dense<0.000000e+00> : vector<16x128xf32>
    %66 = tpu.matmul %64, %65, %cst_31 {dimension_numbers = #tpu.dot_dimension_numbers<[1], [0], [0], [1], [0, 0, 1, 1], [], []>} : vector<16x8xbf16>, vector<8x128xbf16>, vector<16x128xf32> -> vector<16x128xf32>
    %67 = arith.addf %63, %66 : vector<16x128xf32>
    %c80 = arith.constant 80 : index
    %c0_32 = arith.constant 0 : index
    %68 = vector.load %arg3[%c80, %c0_32] : memref<224x16xbf16, #tpu.memory_space<vmem>>, vector<16x8xbf16>
    %69 = vector.extract_strided_slice %56 {offsets = [0, 384], sizes = [8, 128], strides = [1, 1]} : vector<8x512xbf16> to vector<8x128xbf16>
    %cst_33 = arith.constant dense<0.000000e+00> : vector<16x128xf32>
    %70 = tpu.matmul %68, %69, %cst_33 {dimension_numbers = #tpu.dot_dimension_numbers<[1], [0], [0], [1], [0, 0, 1, 1], [], []>} : vector<16x8xbf16>, vector<8x128xbf16>, vector<16x128xf32> -> vector<16x128xf32>
    %71 = arith.addf %67, %70 : vector<16x128xf32>
    %cst_34 = arith.constant dense<0.000000e+00> : vector<128xf32>
    %72 = vector.multi_reduction <add>, %71, %cst_34 [0] : vector<16x128xf32> to vector<128xf32>
    %73 = vector.shape_cast %72 : vector<128xf32> to vector<1x128xf32>
    %74 = arith.mulf %71, %71 : vector<16x128xf32>
    %cst_35 = arith.constant dense<0.000000e+00> : vector<128xf32>
    %75 = vector.multi_reduction <add>, %74, %cst_35 [0] : vector<16x128xf32> to vector<128xf32>
    %76 = vector.shape_cast %75 : vector<128xf32> to vector<1x128xf32>
    %c16_i32 = arith.constant 16 : i32
    %77 = tpu.dynamic_rotate %73 by %c16_i32 dim 1 : vector<1x128xf32>, i32 -> vector<1x128xf32>
    %78 = arith.addf %73, %77 : vector<1x128xf32>
    %c16_i32_36 = arith.constant 16 : i32
    %79 = tpu.dynamic_rotate %76 by %c16_i32_36 dim 1 : vector<1x128xf32>, i32 -> vector<1x128xf32>
    %80 = arith.addf %76, %79 : vector<1x128xf32>
    %c32_i32_37 = arith.constant 32 : i32
    %81 = tpu.dynamic_rotate %78 by %c32_i32_37 dim 1 : vector<1x128xf32>, i32 -> vector<1x128xf32>
    %82 = arith.addf %78, %81 : vector<1x128xf32>
    %c32_i32_38 = arith.constant 32 : i32
    %83 = tpu.dynamic_rotate %80 by %c32_i32_38 dim 1 : vector<1x128xf32>, i32 -> vector<1x128xf32>
    %84 = arith.addf %80, %83 : vector<1x128xf32>
    %c64_i32_39 = arith.constant 64 : i32
    %85 = tpu.dynamic_rotate %82 by %c64_i32_39 dim 1 : vector<1x128xf32>, i32 -> vector<1x128xf32>
    %86 = arith.addf %82, %85 : vector<1x128xf32>
    %c64_i32_40 = arith.constant 64 : i32
    %87 = tpu.dynamic_rotate %84 by %c64_i32_40 dim 1 : vector<1x128xf32>, i32 -> vector<1x128xf32>
    %88 = arith.addf %84, %87 : vector<1x128xf32>
    %cst_41 = arith.constant 7.812500e-03 : f32
    %89 = vector.broadcast %cst_41 : f32 to vector<1x128xf32>
    %90 = arith.mulf %86, %89 : vector<1x128xf32>
    %cst_42 = arith.constant 7.812500e-03 : f32
    %91 = vector.broadcast %cst_42 : f32 to vector<1x128xf32>
    %92 = arith.mulf %88, %91 : vector<1x128xf32>
    %93 = arith.mulf %90, %90 : vector<1x128xf32>
    %94 = arith.subf %92, %93 : vector<1x128xf32>
    %c2 = arith.constant 2 : index
    %c0_43 = arith.constant 0 : index
    %95 = vector.load %arg4[%c2, %c0_43] : memref<4x128xf32, #tpu.memory_space<vmem>>, vector<1x128xf32>
    %c3 = arith.constant 3 : index
    %c0_44 = arith.constant 0 : index
    %96 = vector.load %arg4[%c3, %c0_44] : memref<4x128xf32, #tpu.memory_space<vmem>>, vector<1x128xf32>
    %cst_45 = arith.constant 9.99999974E-6 : f32
    %97 = vector.broadcast %cst_45 : f32 to vector<1x128xf32>
    %98 = arith.addf %94, %97 : vector<1x128xf32>
    %99 = math.rsqrt %98 : vector<1x128xf32>
    %100 = arith.mulf %95, %99 : vector<1x128xf32>
    %101 = arith.mulf %90, %100 : vector<1x128xf32>
    %102 = arith.subf %96, %101 : vector<1x128xf32>
    %103 = vector.broadcast %100 : vector<1x128xf32> to vector<16x128xf32>
    %104 = arith.mulf %71, %103 : vector<16x128xf32>
    %105 = vector.broadcast %102 : vector<1x128xf32> to vector<16x128xf32>
    %106 = arith.addf %104, %105 : vector<16x128xf32>
    %cst_46 = arith.constant 0.000000e+00 : f32
    %107 = vector.broadcast %cst_46 : f32 to vector<16x128xf32>
    %108 = arith.maximumf %106, %107 : vector<16x128xf32>
    %109 = arith.truncf %108 : vector<16x128xf32> to vector<16x128xbf16>
    %c136 = arith.constant 136 : index
    %c0_47 = arith.constant 0 : index
    %110 = vector.load %arg2[%c136, %c0_47] : memref<264x512xbf16, #tpu.memory_space<vmem>>, vector<128x512xbf16>
    %cst_48 = arith.constant dense<0.000000e+00> : vector<16x512xf32>
    %111 = tpu.matmul %109, %110, %cst_48 {dimension_numbers = #tpu.dot_dimension_numbers<[1], [0], [0], [1], [0, 0, 1, 1], [], []>} : vector<16x128xbf16>, vector<128x512xbf16>, vector<16x512xf32> -> vector<16x512xf32>
    %112 = arith.truncf %111 : vector<16x512xf32> to vector<16x512xbf16>
    %c96 = arith.constant 96 : index
    %c0_49 = arith.constant 0 : index
    %113 = vector.load %arg3[%c96, %c0_49] : memref<224x16xbf16, #tpu.memory_space<vmem>>, vector<32x16xbf16>
    %114 = vector.extract_strided_slice %112 {offsets = [0, 0], sizes = [16, 128], strides = [1, 1]} : vector<16x512xbf16> to vector<16x128xbf16>
    %cst_50 = arith.constant dense<0.000000e+00> : vector<32x128xf32>
    %115 = tpu.matmul %113, %114, %cst_50 {dimension_numbers = #tpu.dot_dimension_numbers<[1], [0], [0], [1], [0, 0, 1, 1], [], []>} : vector<32x16xbf16>, vector<16x128xbf16>, vector<32x128xf32> -> vector<32x128xf32>
    %c128 = arith.constant 128 : index
    %c0_51 = arith.constant 0 : index
    %116 = vector.load %arg3[%c128, %c0_51] : memref<224x16xbf16, #tpu.memory_space<vmem>>, vector<32x16xbf16>
    %117 = vector.extract_strided_slice %112 {offsets = [0, 128], sizes = [16, 128], strides = [1, 1]} : vector<16x512xbf16> to vector<16x128xbf16>
    %cst_52 = arith.constant dense<0.000000e+00> : vector<32x128xf32>
    %118 = tpu.matmul %116, %117, %cst_52 {dimension_numbers = #tpu.dot_dimension_numbers<[1], [0], [0], [1], [0, 0, 1, 1], [], []>} : vector<32x16xbf16>, vector<16x128xbf16>, vector<32x128xf32> -> vector<32x128xf32>
    %119 = arith.addf %115, %118 : vector<32x128xf32>
    %c160 = arith.constant 160 : index
    %c0_53 = arith.constant 0 : index
    %120 = vector.load %arg3[%c160, %c0_53] : memref<224x16xbf16, #tpu.memory_space<vmem>>, vector<32x16xbf16>
    %121 = vector.extract_strided_slice %112 {offsets = [0, 256], sizes = [16, 128], strides = [1, 1]} : vector<16x512xbf16> to vector<16x128xbf16>
    %cst_54 = arith.constant dense<0.000000e+00> : vector<32x128xf32>
    %122 = tpu.matmul %120, %121, %cst_54 {dimension_numbers = #tpu.dot_dimension_numbers<[1], [0], [0], [1], [0, 0, 1, 1], [], []>} : vector<32x16xbf16>, vector<16x128xbf16>, vector<32x128xf32> -> vector<32x128xf32>
    %123 = arith.addf %119, %122 : vector<32x128xf32>
    %c192 = arith.constant 192 : index
    %c0_55 = arith.constant 0 : index
    %124 = vector.load %arg3[%c192, %c0_55] : memref<224x16xbf16, #tpu.memory_space<vmem>>, vector<32x16xbf16>
    %125 = vector.extract_strided_slice %112 {offsets = [0, 384], sizes = [16, 128], strides = [1, 1]} : vector<16x512xbf16> to vector<16x128xbf16>
    %cst_56 = arith.constant dense<0.000000e+00> : vector<32x128xf32>
    %126 = tpu.matmul %124, %125, %cst_56 {dimension_numbers = #tpu.dot_dimension_numbers<[1], [0], [0], [1], [0, 0, 1, 1], [], []>} : vector<32x16xbf16>, vector<16x128xbf16>, vector<32x128xf32> -> vector<32x128xf32>
    %127 = arith.addf %123, %126 : vector<32x128xf32>
    %128 = math.tanh %127 : vector<32x128xf32>
    %c0_57 = arith.constant 0 : index
    %c0_58 = arith.constant 0 : index
    %129 = vector.load %arg5[%c0_57, %c0_58] : memref<32x128xf32, #tpu.memory_space<vmem>>, vector<32x128xf32>
    tpu.vector_store %arg5[%c0_57, %c0_58], %128 {strides = array<i32>} : memref<32x128xf32, #tpu.memory_space<vmem>>, vector<32x128xf32>,
    return
  }
  func.func @transform_0(%arg0: i32) -> (i32, i32) {
    %c0_i32 = arith.constant 0 : i32
    %c0_i32_0 = arith.constant 0 : i32
    return %arg0, %c0_i32 : i32, i32
  }
  func.func @transform_1(%arg0: i32) -> (i32, i32) {
    %c0_i32 = arith.constant 0 : i32
    %c0_i32_0 = arith.constant 0 : i32
    %c0_i32_1 = arith.constant 0 : i32
    return %c0_i32, %c0_i32_0 : i32, i32
  }
  func.func @transform_2(%arg0: i32) -> (i32, i32) {
    %c0_i32 = arith.constant 0 : i32
    %c0_i32_0 = arith.constant 0 : i32
    %c0_i32_1 = arith.constant 0 : i32
    return %c0_i32, %c0_i32_0 : i32, i32
  }
  func.func @transform_3(%arg0: i32) -> (i32, i32) {
    %c0_i32 = arith.constant 0 : i32
    %c0_i32_0 = arith.constant 0 : i32
    %c0_i32_1 = arith.constant 0 : i32
    return %c0_i32, %c0_i32_0 : i32, i32
  }
  func.func @transform_4(%arg0: i32) -> (i32, i32) {
    %c0_i32 = arith.constant 0 : i32
    %c0_i32_0 = arith.constant 0 : i32
    return %arg0, %c0_i32 : i32, i32
  }
}

</mosaic_0001>

<llo_original>
// kernel: tpu_custom_call.1
$region0: #{tpu_custom_call.1}
  #allocation0 [shape = 'u32[]', space=smem, size = 0x4, offset = 0x4, fixed_abs, tag = 'smem constant byte address 0x4 - core index']
  #allocation1 [shape = 'u32[72,128]{1,0:T(1,128)}', space=vmem, size = 0x9000, scoped, tag = 'internal scratch']
  %s0 = inlined_call_operand.vmem [shape: f32[2,8], index: 0, kind: input, shape index: {}]
  %s1 = inlined_call_operand.hbm [shape: bf16[264,512], index: 1, kind: input, shape index: {}]
  %s2 = inlined_call_operand.vmem [shape: bf16[224,16], index: 2, kind: input, shape index: {}]
  %s3 = inlined_call_operand.vmem [shape: f32[4,128], index: 3, kind: input, shape index: {}]
  %s4 = inlined_call_operand.hbm [shape: f32[32,128], index: 4, kind: output, shape index: {}]
  %s5 = sld [smem:[#allocation0]]
  $region30: #{tpu_custom_call.1} parent=0
    _
  %s7 = ssub.s32 1, %s5
  %s8 = scalar_select 0, %s7, %s5
  $region1: #{tpu_custom_call.1} parent=0
    #allocation2 [shape = 'u8[270336]{0}', space=vmem, size = 0x42000, scoped, tag = 'input window, operand 1, single buffered']
    #allocation3 [shape = 's32[1]{0}', space=sflag, size = 0x4, scoped, tag = 'scoped memory for tpu_custom_call.1']
    #allocation4 [shape = 's32[1]{0}', space=sflag, size = 0x4, scoped, tag = 'scoped memory for tpu_custom_call.1']
    #allocation5 [shape = 'u8[16384]{0}', space=vmem, size = 0x4000, scoped, tag = 'output window, operand 0, single buffered']
    %9 = vsyncpa [#allocation3], 0
    %10 = vsyncpa [#allocation4], 0
    // Predicated region
    $region2: #{tpu_custom_call.1} parent=1 // pred_check
      _
    $region3: #{tpu_custom_call.1} parent=1 // pred_check_branch
      %12 = sbr.rel (0) target = $region5
    $region4: #{tpu_custom_call.1} parent=1 // pred_region
      _
    $region5: #{tpu_custom_call.1} parent=1 // pred_fallthru
      _
    // Predicated region
    $region6: #{tpu_custom_call.1} parent=1 // pred_check
      _
    $region7: #{tpu_custom_call.1} parent=1 // pred_check_branch
      %14 = sbr.rel (0) target = $region9
    $region8: #{tpu_custom_call.1} parent=1 // pred_region
      %16 = vsyncadd [#allocation3], 0
      %s17 = sshll.u32 %s1, 4
      %s18 = int_to_ptr.hbm [resolvable:$true] %s17
      %s19 = sshll.u32 [#allocation2], 4
      %s20 = int_to_ptr.vmem [resolvable:$true] %s19
      %25 = dma.hbm_to_vmem [thread:$0]  %s18, 8448, %s20, [#allocation3], 256, 256, 16
    $region9: #{tpu_custom_call.1} parent=1 // pred_fallthru
      _
    // Predicated region
    $region10: #{tpu_custom_call.1} parent=1 // pred_check
      _
    $region11: #{tpu_custom_call.1} parent=1 // pred_check_branch
      %27 = sbr.rel (0) target = $region13
    $region12: #{tpu_custom_call.1} parent=1 // pred_region
      _
    $region13: #{tpu_custom_call.1} parent=1 // pred_fallthru
      _
    // Predicated region
    $region14: #{tpu_custom_call.1} parent=1 // pred_check
      _
    $region15: #{tpu_custom_call.1} parent=1 // pred_check_branch
      %29 = sbr.rel (0) target = $region17
    $region16: #{tpu_custom_call.1} parent=1 // pred_region
      _
    $region17: #{tpu_custom_call.1} parent=1 // pred_fallthru
      _
    // Predicated region
    $region18: #{tpu_custom_call.1} parent=1 // pred_check
      _
    $region19: #{tpu_custom_call.1} parent=1 // pred_check_branch
      %31 = sbr.rel (0) target = $region21
    $region20: #{tpu_custom_call.1} parent=1 // pred_region
      %33 = dma.done [#allocation3], 8448
    $region21: #{tpu_custom_call.1} parent=1 // pred_fallthru
      _
    %v35 = vld [vmem:[%s0] sm:$0x3]
    %v36 = vpack.c.bf16 %v35, %v35
    %v37 = vld [vmem:[#allocation2] sm:$0xff]
    %v38 = vld [vmem:[#allocation2 + $0x8] sm:$0xff]
    %v41 = vunpack.c.l.b16 %v37
    %v42 = vunpack.c.h.b16 %v37
    %v43 = vunpack.c.l.b16 %v38
    %v44 = vunpack.c.h.b16 %v38
    %v45 = vpack.c.b16 %v41, %v41
    %v46 = vpack.c.b16 %v42, %v42
    %v47 = vpack.c.b16 %v43, %v43
    %v48 = vpack.c.b16 %v44, %v44
    %vm49 = vcmask 64512
    %v51 = vsel %vm49, %v36, 0
    %vm53 = vcmask 1043456
    %v55 = vsel %vm53, %v45, 0
    %v58 = vsel %vm53, %v46, 0
    %v61 = vsel %vm53, %v47, 0
    %v64 = vsel %vm53, %v48, 0
    %66 = vmatpush.bf16.msra.mxu0 0
    %67 = vmatpush.bf16.msra.mxu0 0
    %68 = vmatpush.bf16.msra.mxu0 0
    %69 = vmatpush.bf16.msra.mxu0 0
    %70 = vmatpush.bf16.msra.mxu0 0
    %71 = vmatpush.bf16.msra.mxu0 0
    %72 = vmatpush.bf16.msra.mxu0 0
    %73 = vmatpush.bf16.msra.mxu0 %v55
    %74 = vmatmul.bf16.gmra.mxu0 %v51
    %v75 = vpop.f32.mrf.mxu0
    %v76 = vadd.f32 0.0, %v75
    %v77 = vpop.f32.mrf.mxu0
    %78 = vdwg.mxu0
    %79 = vmatpush.bf16.msra.mxu0 0
    %80 = vmatpush.bf16.msra.mxu0 0
    %81 = vmatpush.bf16.msra.mxu0 0
    %82 = vmatpush.bf16.msra.mxu0 0
    %83 = vmatpush.bf16.msra.mxu0 0
    %84 = vmatpush.bf16.msra.mxu0 0
    %85 = vmatpush.bf16.msra.mxu0 0
    %86 = vmatpush.bf16.msra.mxu0 %v58
    %87 = vmatmul.bf16.gmra.mxu0 %v51
    %v88 = vpop.f32.mrf.mxu0
    %v89 = vadd.f32 0.0, %v88
    %v90 = vpop.f32.mrf.mxu0
    %91 = vdwg.mxu0
    %92 = vmatpush.bf16.msra.mxu0 0
    %93 = vmatpush.bf16.msra.mxu0 0
    %94 = vmatpush.bf16.msra.mxu0 0
    %95 = vmatpush.bf16.msra.mxu0 0
    %96 = vmatpush.bf16.msra.mxu0 0
    %97 = vmatpush.bf16.msra.mxu0 0
    %98 = vmatpush.bf16.msra.mxu0 0
    %99 = vmatpush.bf16.msra.mxu0 %v61
    %100 = vmatmul.bf16.gmra.mxu0 %v51
    %v101 = vpop.f32.mrf.mxu0
    %v102 = vadd.f32 0.0, %v101
    %v103 = vpop.f32.mrf.mxu0
    %104 = vdwg.mxu0
    %105 = vmatpush.bf16.msra.mxu0 0
    %106 = vmatpush.bf16.msra.mxu0 0
    %107 = vmatpush.bf16.msra.mxu0 0
    %108 = vmatpush.bf16.msra.mxu0 0
    %109 = vmatpush.bf16.msra.mxu0 0
    %110 = vmatpush.bf16.msra.mxu0 0
    %111 = vmatpush.bf16.msra.mxu0 0
    %112 = vmatpush.bf16.msra.mxu0 %v64
    %113 = vmatmul.bf16.gmra.mxu0 %v51
    %v114 = vpop.f32.mrf.mxu0
    %v115 = vadd.f32 0.0, %v114
    %v116 = vpop.f32.mrf.mxu0
    %117 = vdwg.mxu0
    %v118 = vpack.c.bf16 %v89, %v76
    %v119 = vpack.c.bf16 %v115, %v102
    %v120 = vld [vmem:[%s2] sm:$0xf]
    %v121 = vld [vmem:[%s2 + $0x4] sm:$0xf]
    %v123 = vunpack.c.h.b16 %v118
    %v124 = vpack.c.b16 %v123, %v123
    %vm125 = vcmask 15360
    %v127 = vsel %vm125, %v121, 0
    %vm129 = vcmask 1040384
    %v131 = vsel %vm129, %v124, 0
    %133 = vmatpush.bf16.msra.mxu0 0
    %134 = vmatpush.bf16.msra.mxu0 0
    %135 = vmatpush.bf16.msra.mxu0 0
    %136 = vmatpush.bf16.msra.mxu0 0
    %137 = vmatpush.bf16.msra.mxu0 0
    %138 = vmatpush.bf16.msra.mxu0 0
    %139 = vmatpush.bf16.msra.mxu0 0
    %140 = vmatpush.bf16.msra.mxu0 %v131
    %141 = vmatmul.bf16.gmra.mxu0 %v127
    %v142 = vpop.f32.mrf.mxu0
    %v143 = vadd.f32 0.0, %v142
    %v144 = vpop.f32.mrf.mxu0
    %145 = vdwg.mxu0
    %v147 = vsel %vm125, %v120, 0
    %v150 = vsel %vm129, %v118, 0
    %152 = vmatpush.bf16.msra.mxu0 0
    %153 = vmatpush.bf16.msra.mxu0 0
    %154 = vmatpush.bf16.msra.mxu0 0
    %155 = vmatpush.bf16.msra.mxu0 0
    %156 = vmatpush.bf16.msra.mxu0 0
    %157 = vmatpush.bf16.msra.mxu0 0
    %158 = vmatpush.bf16.msra.mxu0 0
    %159 = vmatpush.bf16.msra.mxu0 %v150
    %160 = vmatmul.bf16.gmra.mxu0 %v147
    %v161 = vpop.f32.mrf.mxu0
    %v162 = vadd.f32 %v143, %v161
    %v163 = vpop.f32.mrf.mxu0
    %164 = vdwg.mxu0
    %v165 = vld [vmem:[%s2 + $0x8] sm:$0xf]
    %v167 = vsel %vm125, %v165, 0
    %v170 = vsel %vm129, %v119, 0
    %172 = vmatpush.bf16.msra.mxu0 0
    %173 = vmatpush.bf16.msra.mxu0 0
    %174 = vmatpush.bf16.msra.mxu0 0
    %175 = vmatpush.bf16.msra.mxu0 0
    %176 = vmatpush.bf16.msra.mxu0 0
    %177 = vmatpush.bf16.msra.mxu0 0
    %178 = vmatpush.bf16.msra.mxu0 0
    %179 = vmatpush.bf16.msra.mxu0 %v170
    %180 = vmatmul.bf16.gmra.mxu0 %v167
    %v181 = vpop.f32.mrf.mxu0
    %v182 = vadd.f32 0.0, %v181
    %v183 = vpop.f32.mrf.mxu0
    %184 = vdwg.mxu0
    %v185 = vadd.f32 %v162, %v182
    %v186 = vld [vmem:[%s2 + $0xc] sm:$0xf]
    %v188 = vunpack.c.h.b16 %v119
    %v189 = vpack.c.b16 %v188, %v188
    %v191 = vsel %vm125, %v186, 0
    %v194 = vsel %vm129, %v189, 0
    %196 = vmatpush.bf16.msra.mxu0 0
    %197 = vmatpush.bf16.msra.mxu0 0
    %198 = vmatpush.bf16.msra.mxu0 0
    %199 = vmatpush.bf16.msra.mxu0 0
    %200 = vmatpush.bf16.msra.mxu0 0
    %201 = vmatpush.bf16.msra.mxu0 0
    %202 = vmatpush.bf16.msra.mxu0 0
    %203 = vmatpush.bf16.msra.mxu0 %v194
    %204 = vmatmul.bf16.gmra.mxu0 %v191
    %v205 = vpop.f32.mrf.mxu0
    %v206 = vadd.f32 0.0, %v205
    %v207 = vpop.f32.mrf.mxu0
    %208 = vdwg.mxu0
    %v209 = vadd.f32 %v185, %v206
    %v210 = vrot.slane %v209, 4
    %v211 = vadd.f32 %v209, %v210
    %v212 = vrot.slane %v211, 2
    %v213 = vadd.f32 %v211, %v212
    %v214 = vrot.slane %v213, 1
    %v215 = vadd.f32 %v213, %v214
    %v216 = vmul.f32 %v209, %v209
    %v217 = vrot.slane %v216, 4
    %v218 = vadd.f32 %v216, %v217
    %v219 = vrot.slane %v218, 2
    %v220 = vadd.f32 %v218, %v219
    %v221 = vrot.slane %v220, 1
    %v222 = vadd.f32 %v220, %v221
    %223 = vrot.lane.b32.xlu0 %v215, 32
    %v224 = vpop.permute.xlu0 %223
    %v225 = vadd.f32 %v215, %v224
    %226 = vrot.lane.b32.xlu0 %v222, 32
    %v227 = vpop.permute.xlu0 %226
    %v228 = vadd.f32 %v222, %v227
    %229 = vrot.lane.b32.xlu0 %v225, 64
    %v230 = vpop.permute.xlu0 %229
    %v231 = vadd.f32 %v225, %v230
    %232 = vrot.lane.b32.xlu0 %v228, 64
    %v233 = vpop.permute.xlu0 %232
    %v234 = vadd.f32 %v228, %v233
    %v235 = vmul.f32 %v231, 0.03125
    %v236 = vmul.f32 %v234, 0.03125
    %v237 = vmul.f32 %v235, %v235
    %v238 = vsub.f32 %v236, %v237
    %v239 = vld [vmem:[%s3] sm:$0x1]
    %v240 = vld [vmem:[%s3 + $0x1] sm:$0x1]
    %v241 = vadd.f32 %v238, 1e-05
    %v242 = vrsqrt.pop %v241
    %v243 = vmul.f32 %v242, %v241
    %v244 = vmul.f32 %v243, %v242
    %v245 = vmul.f32 0.5, %v244
    %v246 = vsub.f32 1.5, %v245
    %v247 = vmul.f32 %v242, %v246
    %vm248 = vweird.f32 %v241
    %vm249 = vweird.f32 %v242
    %vm250 = vmor %vm248, %vm249
    %v251 = vsel %vm250, %v242, %v247
    %v252 = vmul.f32 %v239, %v251
    %v253 = vmul.f32 %v235, %v252
    %v254 = vsub.f32 %v240, %v253
    %v255 = vperm.slane %v252, 0
    %v256 = vmul.f32 %v209, %v255
    %v257 = vperm.slane %v254, 0
    %v258 = vadd.f32 %v256, %v257
    %v259 = vmax.f32 %v258, 0.0
    %v260 = vpack.c.bf16 %v259, %v259
    %v261 = vld [vmem:[#allocation2 + $0x10] sm:$0xff]
    %v262 = vld [vmem:[#allocation2 + $0x18] sm:$0xff]
    %v263 = vld [vmem:[#allocation2 + $0x20] sm:$0xff]
    %v264 = vld [vmem:[#allocation2 + $0x28] sm:$0xff]
    %v265 = vld [vmem:[#allocation2 + $0x30] sm:$0xff]
    %v266 = vld [vmem:[#allocation2 + $0x38] sm:$0xff]
    %v267 = vld [vmem:[#allocation2 + $0x40] sm:$0xff]
    %v268 = vld [vmem:[#allocation2 + $0x48] sm:$0xff]
    %v269 = vld [vmem:[#allocation2 + $0x50] sm:$0xff]
    %v270 = vld [vmem:[#allocation2 + $0x58] sm:$0xff]
    %v271 = vld [vmem:[#allocation2 + $0x60] sm:$0xff]
    %v272 = vld [vmem:[#allocation2 + $0x68] sm:$0xff]
    %v273 = vld [vmem:[#allocation2 + $0x70] sm:$0xff]
    %v274 = vld [vmem:[#allocation2 + $0x78] sm:$0xff]
    %v275 = vld [vmem:[#allocation2 + $0x80] sm:$0xff]
    %v276 = vld [vmem:[#allocation2 + $0x88] sm:$0xff]
    %v277 = vld [vmem:[#allocation2 + $0x90] sm:$0xff]
    %v278 = vld [vmem:[#allocation2 + $0x98] sm:$0xff]
    %v279 = vld [vmem:[#allocation2 + $0xa0] sm:$0xff]
    %v280 = vld [vmem:[#allocation2 + $0xa8] sm:$0xff]
    %v281 = vld [vmem:[#allocation2 + $0xb0] sm:$0xff]
    %v282 = vld [vmem:[#allocation2 + $0xb8] sm:$0xff]
    %v283 = vld [vmem:[#allocation2 + $0xc0] sm:$0xff]
    %v284 = vld [vmem:[#allocation2 + $0xc8] sm:$0xff]
    %v285 = vld [vmem:[#allocation2 + $0xd0] sm:$0xff]
    %v286 = vld [vmem:[#allocation2 + $0xd8] sm:$0xff]
    %v287 = vld [vmem:[#allocation2 + $0xe0] sm:$0xff]
    %v288 = vld [vmem:[#allocation2 + $0xe8] sm:$0xff]
    %v289 = vld [vmem:[#allocation2 + $0xf0] sm:$0xff]
    %v290 = vld [vmem:[#allocation2 + $0xf8] sm:$0xff]
    %v291 = vld [vmem:[#allocation2 + $0x100] sm:$0xff]
    %v292 = vld [vmem:[#allocation2 + $0x108] sm:$0xff]
    %v325 = vunpack.c.l.b16 %v261
    %v326 = vunpack.c.h.b16 %v261
    %v327 = vunpack.c.l.b16 %v262
    %v328 = vunpack.c.h.b16 %v262
    %v329 = vunpack.c.l.b16 %v263
    %v330 = vunpack.c.h.b16 %v263
    %v331 = vunpack.c.l.b16 %v264
    %v332 = vunpack.c.h.b16 %v264
    %v333 = vunpack.c.l.b16 %v265
    %v334 = vunpack.c.h.b16 %v265
    %v335 = vunpack.c.l.b16 %v266
    %v336 = vunpack.c.h.b16 %v266
    %v337 = vunpack.c.l.b16 %v267
    %v338 = vunpack.c.h.b16 %v267
    %v339 = vunpack.c.l.b16 %v268
    %v340 = vunpack.c.h.b16 %v268
    %v341 = vunpack.c.l.b16 %v269
    %v342 = vunpack.c.h.b16 %v269
    %v343 = vunpack.c.l.b16 %v270
    %v344 = vunpack.c.h.b16 %v270
    %v345 = vunpack.c.l.b16 %v271
    %v346 = vunpack.c.h.b16 %v271
    %v347 = vunpack.c.l.b16 %v272
    %v348 = vunpack.c.h.b16 %v272
    %v349 = vunpack.c.l.b16 %v273
    %v350 = vunpack.c.h.b16 %v273
    %v351 = vunpack.c.l.b16 %v274
    %v352 = vunpack.c.h.b16 %v274
    %v353 = vunpack.c.l.b16 %v275
    %v354 = vunpack.c.h.b16 %v275
    %v355 = vunpack.c.l.b16 %v276
    %v356 = vunpack.c.h.b16 %v276
    %v357 = vunpack.c.l.b16 %v277
    %v358 = vunpack.c.h.b16 %v277
    %v359 = vunpack.c.l.b16 %v278
    %v360 = vunpack.c.h.b16 %v278
    %v361 = vunpack.c.l.b16 %v279
    %v362 = vunpack.c.h.b16 %v279
    %v363 = vunpack.c.l.b16 %v280
    %v364 = vunpack.c.h.b16 %v280
    %v365 = vunpack.c.l.b16 %v281
    %v366 = vunpack.c.h.b16 %v281
    %v367 = vunpack.c.l.b16 %v282
    %v368 = vunpack.c.h.b16 %v282
    %v369 = vunpack.c.l.b16 %v283
    %v370 = vunpack.c.h.b16 %v283
    %v371 = vunpack.c.l.b16 %v284
    %v372 = vunpack.c.h.b16 %v284
    %v373 = vunpack.c.l.b16 %v285
    %v374 = vunpack.c.h.b16 %v285
    %v375 = vunpack.c.l.b16 %v286
    %v376 = vunpack.c.h.b16 %v286
    %v377 = vunpack.c.l.b16 %v287
    %v378 = vunpack.c.h.b16 %v287
    %v379 = vunpack.c.l.b16 %v288
    %v380 = vunpack.c.h.b16 %v288
    %v381 = vunpack.c.l.b16 %v289
    %v382 = vunpack.c.h.b16 %v289
    %v383 = vunpack.c.l.b16 %v290
    %v384 = vunpack.c.h.b16 %v290
    %v385 = vunpack.c.l.b16 %v291
    %v386 = vunpack.c.h.b16 %v291
    %v387 = vunpack.c.l.b16 %v292
    %v388 = vunpack.c.h.b16 %v292
    %v389 = vpack.c.b16 %v329, %v325
    %v390 = vpack.c.b16 %v330, %v326
    %v391 = vpack.c.b16 %v331, %v327
    %v392 = vpack.c.b16 %v332, %v328
    %v393 = vpack.c.b16 %v337, %v333
    %v394 = vpack.c.b16 %v338, %v334
    %v395 = vpack.c.b16 %v339, %v335
    %v396 = vpack.c.b16 %v340, %v336
    %v397 = vpack.c.b16 %v345, %v341
    %v398 = vpack.c.b16 %v346, %v342
    %v399 = vpack.c.b16 %v347, %v343
    %v400 = vpack.c.b16 %v348, %v344
    %v401 = vpack.c.b16 %v353, %v349
    %v402 = vpack.c.b16 %v354, %v350
    %v403 = vpack.c.b16 %v355, %v351
    %v404 = vpack.c.b16 %v356, %v352
    %v405 = vpack.c.b16 %v361, %v357
    %v406 = vpack.c.b16 %v362, %v358
    %v407 = vpack.c.b16 %v363, %v359
    %v408 = vpack.c.b16 %v364, %v360
    %v409 = vpack.c.b16 %v369, %v365
    %v410 = vpack.c.b16 %v370, %v366
    %v411 = vpack.c.b16 %v371, %v367
    %v412 = vpack.c.b16 %v372, %v368
    %v413 = vpack.c.b16 %v377, %v373
    %v414 = vpack.c.b16 %v378, %v374
    %v415 = vpack.c.b16 %v379, %v375
    %v416 = vpack.c.b16 %v380, %v376
    %v417 = vpack.c.b16 %v385, %v381
    %v418 = vpack.c.b16 %v386, %v382
    %v419 = vpack.c.b16 %v387, %v383
    %v420 = vpack.c.b16 %v388, %v384
    %453 = vmatpush.bf16.msra.mxu0 %v417
    %454 = vmatpush.bf16.msra.mxu0 %v413
    %455 = vmatpush.bf16.msra.mxu0 %v409
    %456 = vmatpush.bf16.msra.mxu0 %v405
    %457 = vmatpush.bf16.msra.mxu0 %v401
    %458 = vmatpush.bf16.msra.mxu0 %v397
    %459 = vmatpush.bf16.msra.mxu0 %v393
    %460 = vmatpush.bf16.msra.mxu0 %v389
    %461 = vmatmul.bf16.gmra.mxu0 %v260
    %v462 = vpop.f32.mrf.mxu0
    %v463 = vadd.f32 0.0, %v462
    %v464 = vpop.f32.mrf.mxu0
    %465 = vdwg.mxu0
    %466 = vmatpush.bf16.msra.mxu0 %v418
    %467 = vmatpush.bf16.msra.mxu0 %v414
    %468 = vmatpush.bf16.msra.mxu0 %v410
    %469 = vmatpush.bf16.msra.mxu0 %v406
    %470 = vmatpush.bf16.msra.mxu0 %v402
    %471 = vmatpush.bf16.msra.mxu0 %v398
    %472 = vmatpush.bf16.msra.mxu0 %v394
    %473 = vmatpush.bf16.msra.mxu0 %v390
    %474 = vmatmul.bf16.gmra.mxu0 %v260
    %v475 = vpop.f32.mrf.mxu0
    %v476 = vadd.f32 0.0, %v475
    %v477 = vpop.f32.mrf.mxu0
    %478 = vdwg.mxu0
    %479 = vmatpush.bf16.msra.mxu0 %v419
    %480 = vmatpush.bf16.msra.mxu0 %v415
    %481 = vmatpush.bf16.msra.mxu0 %v411
    %482 = vmatpush.bf16.msra.mxu0 %v407
    %483 = vmatpush.bf16.msra.mxu0 %v403
    %484 = vmatpush.bf16.msra.mxu0 %v399
    %485 = vmatpush.bf16.msra.mxu0 %v395
    %486 = vmatpush.bf16.msra.mxu0 %v391
    %487 = vmatmul.bf16.gmra.mxu0 %v260
    %v488 = vpop.f32.mrf.mxu0
    %v489 = vadd.f32 0.0, %v488
    %v490 = vpop.f32.mrf.mxu0
    %491 = vdwg.mxu0
    %492 = vmatpush.bf16.msra.mxu0 %v420
    %493 = vmatpush.bf16.msra.mxu0 %v416
    %494 = vmatpush.bf16.msra.mxu0 %v412
    %495 = vmatpush.bf16.msra.mxu0 %v408
    %496 = vmatpush.bf16.msra.mxu0 %v404
    %497 = vmatpush.bf16.msra.mxu0 %v400
    %498 = vmatpush.bf16.msra.mxu0 %v396
    %499 = vmatpush.bf16.msra.mxu0 %v392
    %500 = vmatmul.bf16.gmra.mxu0 %v260
    %v501 = vpop.f32.mrf.mxu0
    %v502 = vadd.f32 0.0, %v501
    %v503 = vpop.f32.mrf.mxu0
    %504 = vdwg.mxu0
    %v505 = vpack.c.bf16 %v476, %v463
    %v506 = vpack.c.bf16 %v502, %v489
    %v507 = vld [vmem:[%s2 + $0x10] sm:$0xf]
    %v508 = vld [vmem:[%s2 + $0x14] sm:$0xf]
    %v509 = vld [vmem:[%s2 + $0x18] sm:$0xf]
    %v510 = vld [vmem:[%s2 + $0x1c] sm:$0xf]
    %v513 = vunpack.c.l.b16 %v509
    %v514 = vunpack.c.l.b16 %v510
    %v515 = vpack.c.b16 %v514, %v513
    %v517 = vunpack.c.h.b16 %v505
    %v518 = vpack.c.b16 %v517, %v517
    %v520 = vsel %vm49, %v515, 0
    %v523 = vsel %vm53, %v518, 0
    %525 = vmatpush.bf16.msra.mxu0 0
    %526 = vmatpush.bf16.msra.mxu0 0
    %527 = vmatpush.bf16.msra.mxu0 0
    %528 = vmatpush.bf16.msra.mxu0 0
    %529 = vmatpush.bf16.msra.mxu0 0
    %530 = vmatpush.bf16.msra.mxu0 0
    %531 = vmatpush.bf16.msra.mxu0 0
    %532 = vmatpush.bf16.msra.mxu0 %v523
    %533 = vmatmul.bf16.gmra.mxu0 %v520
    %v534 = vpop.f32.mrf.mxu0
    %v535 = vadd.f32 0.0, %v534
    %v536 = vpop.f32.mrf.mxu0
    %v537 = vadd.f32 0.0, %v536
    %538 = vdwg.mxu0
    %v541 = vunpack.c.l.b16 %v507
    %v542 = vunpack.c.l.b16 %v508
    %v543 = vpack.c.b16 %v542, %v541
    %v545 = vsel %vm49, %v543, 0
    %v548 = vsel %vm53, %v505, 0
    %550 = vmatpush.bf16.msra.mxu0 0
    %551 = vmatpush.bf16.msra.mxu0 0
    %552 = vmatpush.bf16.msra.mxu0 0
    %553 = vmatpush.bf16.msra.mxu0 0
    %554 = vmatpush.bf16.msra.mxu0 0
    %555 = vmatpush.bf16.msra.mxu0 0
    %556 = vmatpush.bf16.msra.mxu0 0
    %557 = vmatpush.bf16.msra.mxu0 %v548
    %558 = vmatmul.bf16.gmra.mxu0 %v545
    %v559 = vpop.f32.mrf.mxu0
    %v560 = vadd.f32 %v535, %v559
    %v561 = vpop.f32.mrf.mxu0
    %v562 = vadd.f32 %v537, %v561
    %563 = vdwg.mxu0
    %v564 = vld [vmem:[%s2 + $0x20] sm:$0xf]
    %v565 = vld [vmem:[%s2 + $0x24] sm:$0xf]
    %v568 = vunpack.c.l.b16 %v564
    %v569 = vunpack.c.l.b16 %v565
    %v570 = vpack.c.b16 %v569, %v568
    %v572 = vsel %vm49, %v570, 0
    %v575 = vsel %vm53, %v506, 0
    %577 = vmatpush.bf16.msra.mxu0 0
    %578 = vmatpush.bf16.msra.mxu0 0
    %579 = vmatpush.bf16.msra.mxu0 0
    %580 = vmatpush.bf16.msra.mxu0 0
    %581 = vmatpush.bf16.msra.mxu0 0
    %582 = vmatpush.bf16.msra.mxu0 0
    %583 = vmatpush.bf16.msra.mxu0 0
    %584 = vmatpush.bf16.msra.mxu0 %v575
    %585 = vmatmul.bf16.gmra.mxu0 %v572
    %v586 = vpop.f32.mrf.mxu0
    %v587 = vadd.f32 0.0, %v586
    %v588 = vpop.f32.mrf.mxu0
    %v589 = vadd.f32 0.0, %v588
    %590 = vdwg.mxu0
    %v591 = vadd.f32 %v560, %v587
    %v592 = vadd.f32 %v562, %v589
    %v593 = vld [vmem:[%s2 + $0x28] sm:$0xf]
    %v594 = vld [vmem:[%s2 + $0x2c] sm:$0xf]
    %v597 = vunpack.c.l.b16 %v593
    %v598 = vunpack.c.l.b16 %v594
    %v599 = vpack.c.b16 %v598, %v597
    %v601 = vunpack.c.h.b16 %v506
    %v602 = vpack.c.b16 %v601, %v601
    %v604 = vsel %vm49, %v599, 0
    %v607 = vsel %vm53, %v602, 0
    %609 = vmatpush.bf16.msra.mxu0 0
    %610 = vmatpush.bf16.msra.mxu0 0
    %611 = vmatpush.bf16.msra.mxu0 0
    %612 = vmatpush.bf16.msra.mxu0 0
    %613 = vmatpush.bf16.msra.mxu0 0
    %614 = vmatpush.bf16.msra.mxu0 0
    %615 = vmatpush.bf16.msra.mxu0 0
    %616 = vmatpush.bf16.msra.mxu0 %v607
    %617 = vmatmul.bf16.gmra.mxu0 %v604
    %v618 = vpop.f32.mrf.mxu0
    %v619 = vadd.f32 0.0, %v618
    %v620 = vpop.f32.mrf.mxu0
    %v621 = vadd.f32 0.0, %v620
    %622 = vdwg.mxu0
    %v623 = vadd.f32 %v591, %v619
    %v624 = vadd.f32 %v592, %v621
    %v625 = vadd.f32 %v623, %v624
    %v626 = vrot.slane %v625, 4
    %v627 = vadd.f32 %v625, %v626
    %v628 = vrot.slane %v627, 2
    %v629 = vadd.f32 %v627, %v628
    %v630 = vrot.slane %v629, 1
    %v631 = vadd.f32 %v629, %v630
    %v632 = vmul.f32 %v623, %v623
    %v633 = vmul.f32 %v624, %v624
    %v634 = vadd.f32 %v632, %v633
    %v635 = vrot.slane %v634, 4
    %v636 = vadd.f32 %v634, %v635
    %v637 = vrot.slane %v636, 2
    %v638 = vadd.f32 %v636, %v637
    %v639 = vrot.slane %v638, 1
    %v640 = vadd.f32 %v638, %v639
    %641 = vrot.lane.b32.xlu0 %v631, 16
    %v642 = vpop.permute.xlu0 %641
    %v643 = vadd.f32 %v631, %v642
    %644 = vrot.lane.b32.xlu0 %v640, 16
    %v645 = vpop.permute.xlu0 %644
    %v646 = vadd.f32 %v640, %v645
    %647 = vrot.lane.b32.xlu0 %v643, 32
    %v648 = vpop.permute.xlu0 %647
    %v649 = vadd.f32 %v643, %v648
    %650 = vrot.lane.b32.xlu0 %v646, 32
    %v651 = vpop.permute.xlu0 %650
    %v652 = vadd.f32 %v646, %v651
    %653 = vrot.lane.b32.xlu0 %v649, 64
    %v654 = vpop.permute.xlu0 %653
    %v655 = vadd.f32 %v649, %v654
    %656 = vrot.lane.b32.xlu0 %v652, 64
    %v657 = vpop.permute.xlu0 %656
    %v658 = vadd.f32 %v652, %v657
    %v659 = vmul.f32 %v655, 0.0078125
    %v660 = vmul.f32 %v658, 0.0078125
    %v661 = vmul.f32 %v659, %v659
    %v662 = vsub.f32 %v660, %v661
    %v663 = vld [vmem:[%s3 + $0x2] sm:$0x1]
    %v664 = vld [vmem:[%s3 + $0x3] sm:$0x1]
    %v665 = vadd.f32 %v662, 1e-05
    %v666 = vrsqrt.pop %v665
    %v667 = vmul.f32 %v666, %v665
    %v668 = vmul.f32 %v667, %v666
    %v669 = vmul.f32 0.5, %v668
    %v670 = vsub.f32 1.5, %v669
    %v671 = vmul.f32 %v666, %v670
    %vm672 = vweird.f32 %v665
    %vm673 = vweird.f32 %v666
    %vm674 = vmor %vm672, %vm673
    %v675 = vsel %vm674, %v666, %v671
    %v676 = vmul.f32 %v663, %v675
    %v677 = vmul.f32 %v659, %v676
    %v678 = vsub.f32 %v664, %v677
    %v679 = vperm.slane %v676, 0
    %v680 = vmul.f32 %v623, %v679
    %v681 = vmul.f32 %v624, %v679
    %v682 = vperm.slane %v678, 0
    %v683 = vadd.f32 %v680, %v682
    %v684 = vadd.f32 %v681, %v682
    %v685 = vmax.f32 %v683, 0.0
    %v686 = vmax.f32 %v684, 0.0
    %v687 = vpack.c.bf16 %v686, %v685
    %v688 = vld [vmem:[#allocation2 + $0x110] sm:$0xff]
    %v689 = vld [vmem:[#allocation2 + $0x118] sm:$0xff]
    %v690 = vld [vmem:[#allocation2 + $0x120] sm:$0xff]
    %v691 = vld [vmem:[#allocation2 + $0x128] sm:$0xff]
    %v692 = vld [vmem:[#allocation2 + $0x130] sm:$0xff]
    %v693 = vld [vmem:[#allocation2 + $0x138] sm:$0xff]
    %v694 = vld [vmem:[#allocation2 + $0x140] sm:$0xff]
    %v695 = vld [vmem:[#allocation2 + $0x148] sm:$0xff]
    %v696 = vld [vmem:[#allocation2 + $0x150] sm:$0xff]
    %v697 = vld [vmem:[#allocation2 + $0x158] sm:$0xff]
    %v698 = vld [vmem:[#allocation2 + $0x160] sm:$0xff]
    %v699 = vld [vmem:[#allocation2 + $0x168] sm:$0xff]
    %v700 = vld [vmem:[#allocation2 + $0x170] sm:$0xff]
    %v701 = vld [vmem:[#allocation2 + $0x178] sm:$0xff]
    %v702 = vld [vmem:[#allocation2 + $0x180] sm:$0xff]
    %v703 = vld [vmem:[#allocation2 + $0x188] sm:$0xff]
    %v704 = vld [vmem:[#allocation2 + $0x190] sm:$0xff]
    %v705 = vld [vmem:[#allocation2 + $0x198] sm:$0xff]
    %v706 = vld [vmem:[#allocation2 + $0x1a0] sm:$0xff]
    %v707 = vld [vmem:[#allocation2 + $0x1a8] sm:$0xff]
    %v708 = vld [vmem:[#allocation2 + $0x1b0] sm:$0xff]
    %v709 = vld [vmem:[#allocation2 + $0x1b8] sm:$0xff]
    %v710 = vld [vmem:[#allocation2 + $0x1c0] sm:$0xff]
    %v711 = vld [vmem:[#allocation2 + $0x1c8] sm:$0xff]
    %v712 = vld [vmem:[#allocation2 + $0x1d0] sm:$0xff]
    %v713 = vld [vmem:[#allocation2 + $0x1d8] sm:$0xff]
    %v714 = vld [vmem:[#allocation2 + $0x1e0] sm:$0xff]
    %v715 = vld [vmem:[#allocation2 + $0x1e8] sm:$0xff]
    %v716 = vld [vmem:[#allocation2 + $0x1f0] sm:$0xff]
    %v717 = vld [vmem:[#allocation2 + $0x1f8] sm:$0xff]
    %v718 = vld [vmem:[#allocation2 + $0x200] sm:$0xff]
    %v719 = vld [vmem:[#allocation2 + $0x208] sm:$0xff]
    %v752 = vunpack.c.l.b16 %v688
    %v753 = vunpack.c.h.b16 %v688
    %v754 = vunpack.c.l.b16 %v689
    %v755 = vunpack.c.h.b16 %v689
    %v756 = vunpack.c.l.b16 %v690
    %v757 = vunpack.c.h.b16 %v690
    %v758 = vunpack.c.l.b16 %v691
    %v759 = vunpack.c.h.b16 %v691
    %v760 = vunpack.c.l.b16 %v692
    %v761 = vunpack.c.h.b16 %v692
    %v762 = vunpack.c.l.b16 %v693
    %v763 = vunpack.c.h.b16 %v693
    %v764 = vunpack.c.l.b16 %v694
    %v765 = vunpack.c.h.b16 %v694
    %v766 = vunpack.c.l.b16 %v695
    %v767 = vunpack.c.h.b16 %v695
    %v768 = vunpack.c.l.b16 %v696
    %v769 = vunpack.c.h.b16 %v696
    %v770 = vunpack.c.l.b16 %v697
    %v771 = vunpack.c.h.b16 %v697
    %v772 = vunpack.c.l.b16 %v698
    %v773 = vunpack.c.h.b16 %v698
    %v774 = vunpack.c.l.b16 %v699
    %v775 = vunpack.c.h.b16 %v699
    %v776 = vunpack.c.l.b16 %v700
    %v777 = vunpack.c.h.b16 %v700
    %v778 = vunpack.c.l.b16 %v701
    %v779 = vunpack.c.h.b16 %v701
    %v780 = vunpack.c.l.b16 %v702
    %v781 = vunpack.c.h.b16 %v702
    %v782 = vunpack.c.l.b16 %v703
    %v783 = vunpack.c.h.b16 %v703
    %v784 = vunpack.c.l.b16 %v704
    %v785 = vunpack.c.h.b16 %v704
    %v786 = vunpack.c.l.b16 %v705
    %v787 = vunpack.c.h.b16 %v705
    %v788 = vunpack.c.l.b16 %v706
    %v789 = vunpack.c.h.b16 %v706
    %v790 = vunpack.c.l.b16 %v707
    %v791 = vunpack.c.h.b16 %v707
    %v792 = vunpack.c.l.b16 %v708
    %v793 = vunpack.c.h.b16 %v708
    %v794 = vunpack.c.l.b16 %v709
    %v795 = vunpack.c.h.b16 %v709
    %v796 = vunpack.c.l.b16 %v710
    %v797 = vunpack.c.h.b16 %v710
    %v798 = vunpack.c.l.b16 %v711
    %v799 = vunpack.c.h.b16 %v711
    %v800 = vunpack.c.l.b16 %v712
    %v801 = vunpack.c.h.b16 %v712
    %v802 = vunpack.c.l.b16 %v713
    %v803 = vunpack.c.h.b16 %v713
    %v804 = vunpack.c.l.b16 %v714
    %v805 = vunpack.c.h.b16 %v714
    %v806 = vunpack.c.l.b16 %v715
    %v807 = vunpack.c.h.b16 %v715
    %v808 = vunpack.c.l.b16 %v716
    %v809 = vunpack.c.h.b16 %v716
    %v810 = vunpack.c.l.b16 %v717
    %v811 = vunpack.c.h.b16 %v717
    %v812 = vunpack.c.l.b16 %v718
    %v813 = vunpack.c.h.b16 %v718
    %v814 = vunpack.c.l.b16 %v719
    %v815 = vunpack.c.h.b16 %v719
    %v816 = vpack.c.b16 %v756, %v752
    %v817 = vpack.c.b16 %v757, %v753
    %v818 = vpack.c.b16 %v758, %v754
    %v819 = vpack.c.b16 %v759, %v755
    %v820 = vpack.c.b16 %v764, %v760
    %v821 = vpack.c.b16 %v765, %v761
    %v822 = vpack.c.b16 %v766, %v762
    %v823 = vpack.c.b16 %v767, %v763
    %v824 = vpack.c.b16 %v772, %v768
    %v825 = vpack.c.b16 %v773, %v769
    %v826 = vpack.c.b16 %v774, %v770
    %v827 = vpack.c.b16 %v775, %v771
    %v828 = vpack.c.b16 %v780, %v776
    %v829 = vpack.c.b16 %v781, %v777
    %v830 = vpack.c.b16 %v782, %v778
    %v831 = vpack.c.b16 %v783, %v779
    %v832 = vpack.c.b16 %v788, %v784
    %v833 = vpack.c.b16 %v789, %v785
    %v834 = vpack.c.b16 %v790, %v786
    %v835 = vpack.c.b16 %v791, %v787
    %v836 = vpack.c.b16 %v796, %v792
    %v837 = vpack.c.b16 %v797, %v793
    %v838 = vpack.c.b16 %v798, %v794
    %v839 = vpack.c.b16 %v799, %v795
    %v840 = vpack.c.b16 %v804, %v800
    %v841 = vpack.c.b16 %v805, %v801
    %v842 = vpack.c.b16 %v806, %v802
    %v843 = vpack.c.b16 %v807, %v803
    %v844 = vpack.c.b16 %v812, %v808
    %v845 = vpack.c.b16 %v813, %v809
    %v846 = vpack.c.b16 %v814, %v810
    %v847 = vpack.c.b16 %v815, %v811
    %880 = vmatpush.bf16.msra.mxu0 %v844
    %881 = vmatpush.bf16.msra.mxu0 %v840
    %882 = vmatpush.bf16.msra.mxu0 %v836
    %883 = vmatpush.bf16.msra.mxu0 %v832
    %884 = vmatpush.bf16.msra.mxu0 %v828
    %885 = vmatpush.bf16.msra.mxu0 %v824
    %886 = vmatpush.bf16.msra.mxu0 %v820
    %887 = vmatpush.bf16.msra.mxu0 %v816
    %888 = vmatmul.bf16.gmra.mxu0 %v687
    %v889 = vpop.f32.mrf.mxu0
    %v890 = vadd.f32 0.0, %v889
    %v891 = vpop.f32.mrf.mxu0
    %v892 = vadd.f32 0.0, %v891
    %893 = vdwg.mxu0
    %894 = vmatpush.bf16.msra.mxu0 %v845
    %895 = vmatpush.bf16.msra.mxu0 %v841
    %896 = vmatpush.bf16.msra.mxu0 %v837
    %897 = vmatpush.bf16.msra.mxu0 %v833
    %898 = vmatpush.bf16.msra.mxu0 %v829
    %899 = vmatpush.bf16.msra.mxu0 %v825
    %900 = vmatpush.bf16.msra.mxu0 %v821
    %901 = vmatpush.bf16.msra.mxu0 %v817
    %902 = vmatmul.bf16.gmra.mxu0 %v687
    %v903 = vpop.f32.mrf.mxu0
    %v904 = vadd.f32 0.0, %v903
    %v905 = vpop.f32.mrf.mxu0
    %v906 = vadd.f32 0.0, %v905
    %907 = vdwg.mxu0
    %908 = vmatpush.bf16.msra.mxu0 %v846
    %909 = vmatpush.bf16.msra.mxu0 %v842
    %910 = vmatpush.bf16.msra.mxu0 %v838
    %911 = vmatpush.bf16.msra.mxu0 %v834
    %912 = vmatpush.bf16.msra.mxu0 %v830
    %913 = vmatpush.bf16.msra.mxu0 %v826
    %914 = vmatpush.bf16.msra.mxu0 %v822
    %915 = vmatpush.bf16.msra.mxu0 %v818
    %916 = vmatmul.bf16.gmra.mxu0 %v687
    %v917 = vpop.f32.mrf.mxu0
    %v918 = vadd.f32 0.0, %v917
    %v919 = vpop.f32.mrf.mxu0
    %v920 = vadd.f32 0.0, %v919
    %921 = vdwg.mxu0
    %922 = vmatpush.bf16.msra.mxu0 %v847
    %923 = vmatpush.bf16.msra.mxu0 %v843
    %924 = vmatpush.bf16.msra.mxu0 %v839
    %925 = vmatpush.bf16.msra.mxu0 %v835
    %926 = vmatpush.bf16.msra.mxu0 %v831
    %927 = vmatpush.bf16.msra.mxu0 %v827
    %928 = vmatpush.bf16.msra.mxu0 %v823
    %929 = vmatpush.bf16.msra.mxu0 %v819
    %930 = vmatmul.bf16.gmra.mxu0 %v687
    %v931 = vpop.f32.mrf.mxu0
    %v932 = vadd.f32 0.0, %v931
    %v933 = vpop.f32.mrf.mxu0
    %v934 = vadd.f32 0.0, %v933
    %935 = vdwg.mxu0
    %v936 = vpack.c.bf16 %v904, %v890
    %v937 = vpack.c.bf16 %v932, %v918
    %v938 = vpack.c.bf16 %v906, %v892
    %v939 = vpack.c.bf16 %v934, %v920
    %v940 = vld [vmem:[%s2 + $0x30] sm:$0xf]
    %v941 = vld [vmem:[%s2 + $0x34] sm:$0xf]
    %v942 = vld [vmem:[%s2 + $0x38] sm:$0xf]
    %v943 = vld [vmem:[%s2 + $0x3c] sm:$0xf]
    %v944 = vld [vmem:[%s2 + $0x40] sm:$0xf]
    %v945 = vld [vmem:[%s2 + $0x44] sm:$0xf]
    %v946 = vld [vmem:[%s2 + $0x48] sm:$0xf]
    %v947 = vld [vmem:[%s2 + $0x4c] sm:$0xf]
    %v952 = vunpack.c.l.b16 %v944
    %v953 = vunpack.c.l.b16 %v945
    %v954 = vunpack.c.l.b16 %v946
    %v955 = vunpack.c.l.b16 %v947
    %v956 = vpack.c.b16 %v953, %v952
    %v957 = vpack.c.b16 %v955, %v954
    %v960 = vunpack.c.h.b16 %v936
    %v961 = vunpack.c.h.b16 %v938
    %v962 = vpack.c.b16 %v961, %v960
    %vm964 = vcmask 130048
    %v966 = vsel %vm964, %v956, 0
    %v969 = vsel %vm964, %v957, 0
    %971 = vmatpush.bf16.msra.mxu0 0
    %972 = vmatpush.bf16.msra.mxu0 0
    %973 = vmatpush.bf16.msra.mxu0 0
    %974 = vmatpush.bf16.msra.mxu0 0
    %975 = vmatpush.bf16.msra.mxu0 0
    %976 = vmatpush.bf16.msra.mxu0 0
    %977 = vmatpush.bf16.msra.mxu0 0
    %978 = vmatpush.bf16.msra.mxu0 %v962
    %979 = vmatmul.bf16.gmra.mxu0 %v966
    %v980 = vpop.f32.mrf.mxu0
    %v981 = vadd.f32 0.0, %v980
    %v982 = vpop.f32.mrf.mxu0
    %v983 = vadd.f32 0.0, %v982
    %984 = vmatmul.bf16.gmra.mxu0 %v969
    %v985 = vpop.f32.mrf.mxu0
    %v986 = vadd.f32 0.0, %v985
    %v987 = vpop.f32.mrf.mxu0
    %v988 = vadd.f32 0.0, %v987
    %989 = vdwg.mxu0
    %v994 = vunpack.c.l.b16 %v940
    %v995 = vunpack.c.l.b16 %v941
    %v996 = vunpack.c.l.b16 %v942
    %v997 = vunpack.c.l.b16 %v943
    %v998 = vpack.c.b16 %v995, %v994
    %v999 = vpack.c.b16 %v997, %v996
    %v1000 = vunpack.c.l.b16 %v936
    %v1001 = vunpack.c.l.b16 %v938
    %v1002 = vpack.c.b16 %v1001, %v1000
    %v1005 = vsel %vm964, %v998, 0
    %v1008 = vsel %vm964, %v999, 0
    %1010 = vmatpush.bf16.msra.mxu0 0
    %1011 = vmatpush.bf16.msra.mxu0 0
    %1012 = vmatpush.bf16.msra.mxu0 0
    %1013 = vmatpush.bf16.msra.mxu0 0
    %1014 = vmatpush.bf16.msra.mxu0 0
    %1015 = vmatpush.bf16.msra.mxu0 0
    %1016 = vmatpush.bf16.msra.mxu0 0
    %1017 = vmatpush.bf16.msra.mxu0 %v1002
    %1018 = vmatmul.bf16.gmra.mxu0 %v1005
    %v1019 = vpop.f32.mrf.mxu0
    %v1020 = vadd.f32 %v981, %v1019
    %v1021 = vpop.f32.mrf.mxu0
    %v1022 = vadd.f32 %v983, %v1021
    %1023 = vmatmul.bf16.gmra.mxu0 %v1008
    %v1024 = vpop.f32.mrf.mxu0
    %v1025 = vadd.f32 %v986, %v1024
    %v1026 = vpop.f32.mrf.mxu0
    %v1027 = vadd.f32 %v988, %v1026
    %1028 = vdwg.mxu0
    %v1029 = vld [vmem:[%s2 + $0x50] sm:$0xf]
    %v1030 = vld [vmem:[%s2 + $0x54] sm:$0xf]
    %v1031 = vld [vmem:[%s2 + $0x58] sm:$0xf]
    %v1032 = vld [vmem:[%s2 + $0x5c] sm:$0xf]
    %v1037 = vunpack.c.l.b16 %v1029
    %v1038 = vunpack.c.l.b16 %v1030
    %v1039 = vunpack.c.l.b16 %v1031
    %v1040 = vunpack.c.l.b16 %v1032
    %v1041 = vpack.c.b16 %v1038, %v1037
    %v1042 = vpack.c.b16 %v1040, %v1039
    %v1045 = vunpack.c.l.b16 %v937
    %v1046 = vunpack.c.l.b16 %v939
    %v1047 = vpack.c.b16 %v1046, %v1045
    %v1050 = vsel %vm964, %v1041, 0
    %v1053 = vsel %vm964, %v1042, 0
    %1055 = vmatpush.bf16.msra.mxu0 0
    %1056 = vmatpush.bf16.msra.mxu0 0
    %1057 = vmatpush.bf16.msra.mxu0 0
    %1058 = vmatpush.bf16.msra.mxu0 0
    %1059 = vmatpush.bf16.msra.mxu0 0
    %1060 = vmatpush.bf16.msra.mxu0 0
    %1061 = vmatpush.bf16.msra.mxu0 0
    %1062 = vmatpush.bf16.msra.mxu0 %v1047
    %1063 = vmatmul.bf16.gmra.mxu0 %v1050
    %v1064 = vpop.f32.mrf.mxu0
    %v1065 = vadd.f32 0.0, %v1064
    %v1066 = vpop.f32.mrf.mxu0
    %v1067 = vadd.f32 0.0, %v1066
    %1068 = vmatmul.bf16.gmra.mxu0 %v1053
    %v1069 = vpop.f32.mrf.mxu0
    %v1070 = vadd.f32 0.0, %v1069
    %v1071 = vpop.f32.mrf.mxu0
    %v1072 = vadd.f32 0.0, %v1071
    %1073 = vdwg.mxu0
    %v1074 = vadd.f32 %v1020, %v1065
    %v1075 = vadd.f32 %v1022, %v1067
    %v1076 = vadd.f32 %v1025, %v1070
    %v1077 = vadd.f32 %v1027, %v1072
    %v1078 = vld [vmem:[%s2 + $0x60] sm:$0xf]
    %v1079 = vld [vmem:[%s2 + $0x64] sm:$0xf]
    %v1080 = vld [vmem:[%s2 + $0x68] sm:$0xf]
    %v1081 = vld [vmem:[%s2 + $0x6c] sm:$0xf]
    %v1086 = vunpack.c.l.b16 %v1078
    %v1087 = vunpack.c.l.b16 %v1079
    %v1088 = vunpack.c.l.b16 %v1080
    %v1089 = vunpack.c.l.b16 %v1081
    %v1090 = vpack.c.b16 %v1087, %v1086
    %v1091 = vpack.c.b16 %v1089, %v1088
    %v1092 = vunpack.c.h.b16 %v937
    %v1093 = vunpack.c.h.b16 %v939
    %v1094 = vpack.c.b16 %v1093, %v1092
    %v1097 = vsel %vm964, %v1090, 0
    %v1100 = vsel %vm964, %v1091, 0
    %1102 = vmatpush.bf16.msra.mxu0 0
    %1103 = vmatpush.bf16.msra.mxu0 0
    %1104 = vmatpush.bf16.msra.mxu0 0
    %1105 = vmatpush.bf16.msra.mxu0 0
    %1106 = vmatpush.bf16.msra.mxu0 0
    %1107 = vmatpush.bf16.msra.mxu0 0
    %1108 = vmatpush.bf16.msra.mxu0 0
    %1109 = vmatpush.bf16.msra.mxu0 %v1094
    %1110 = vmatmul.bf16.gmra.mxu0 %v1097
    %v1111 = vpop.f32.mrf.mxu0
    %v1112 = vadd.f32 0.0, %v1111
    %v1113 = vpop.f32.mrf.mxu0
    %v1114 = vadd.f32 0.0, %v1113
    %1115 = vmatmul.bf16.gmra.mxu0 %v1100
    %v1116 = vpop.f32.mrf.mxu0
    %v1117 = vadd.f32 0.0, %v1116
    %v1118 = vpop.f32.mrf.mxu0
    %v1119 = vadd.f32 0.0, %v1118
    %1120 = vdwg.mxu0
    %v1121 = vadd.f32 %v1074, %v1112
    %v1122 = vadd.f32 %v1075, %v1114
    %v1123 = vadd.f32 %v1076, %v1117
    %v1124 = vadd.f32 %v1077, %v1119
    %v1125 = vtanh.pop %v1121
    %v1126 = vtanh.pop %v1122
    %v1127 = vtanh.pop %v1123
    %v1128 = vtanh.pop %v1124
    %1129 = vst [vmem:[#allocation5] sm:$0xff] %v1125
    %1130 = vst [vmem:[#allocation5 + $0x8] sm:$0xff] %v1126
    %1131 = vst [vmem:[#allocation5 + $0x10] sm:$0xff] %v1127
    %1132 = vst [vmem:[#allocation5 + $0x18] sm:$0xff] %v1128
    // Predicated region
    $region22: #{tpu_custom_call.1} parent=1 // pred_check
      _
    $region23: #{tpu_custom_call.1} parent=1 // pred_check_branch
      %1134 = sbr.rel (0) target = $region25
    $region24: #{tpu_custom_call.1} parent=1 // pred_region
      %1136 = vsyncadd [#allocation4], 0
      %s1137 = sshll.u32 [#allocation5], 4
      %s1138 = int_to_ptr.vmem [resolvable:$true] %s1137
      %s1139 = sshll.u32 %s4, 4
      %s1140 = int_to_ptr.hbm [resolvable:$true] %s1139
      %1145 = dma.vmem_to_hbm [thread:$0]  %s1138, 512, %s1140, [#allocation4], 128, 128, 8
    $region25: #{tpu_custom_call.1} parent=1 // pred_fallthru
      _
    // Predicated region
    $region26: #{tpu_custom_call.1} parent=1 // pred_check
      _
    $region27: #{tpu_custom_call.1} parent=1 // pred_check_branch
      %1147 = sbr.rel (0) target = $region29
    $region28: #{tpu_custom_call.1} parent=1 // pred_region
      %1149 = dma.done [#allocation4], 512
    $region29: #{tpu_custom_call.1} parent=1 // pred_fallthru
      _
    %1150 = vsyncpa [#allocation3], 1
    %1151 = vsyncpa [#allocation4], 1

</llo_original>
